<compile_context>
chip_gen: v5e
topology: v5e:2x2
jax: 0.10.0
libtpu: 0.0.40
codegen_flags: <defaults>
</compile_context>

<pallas_src>
import jax
import jax.numpy as jnp
import numpy as np
from jax.experimental import pallas as pl
from jax.experimental.pallas import tpu as pltpu

VIRTUAL_ATOM_FEATURE_PLACEHOLDER = -1  # value used in the original codebase


def atom_embedding_kernel(ind_ref, x_ref, wblk_ref, e_in_ref, dsel_ref, b2_ref, o_ref):
    """One grid step handles tnp packed rows (= tnp * R logical rows).

    ind_ref : (tnp, R)       int32  indicators, R logical rows per vector row
    x_ref   : (tnp, R*Kp)    f32    packed [x0|x1] features (lane-dense)
    wblk_ref: (R*Kp, R*Dg)   f32    block-diag kron(I_R, [W;W])   (resident)
    e_in_ref: (R, R*Kp)      f32    one-hot: x1 lanes of segment j (resident)
    dsel_ref: (R, R*Dg)      f32    (virt - b) in output segment j (resident)
    b2_ref  : (1, R*Dg)      f32    2*b tiled over the R segments  (resident)
    o_ref   : (tnp, R*Dg)    f32    packed summed pair embedding
    """
    mask_f = (ind_ref[...] == VIRTUAL_ATOM_FEATURE_PLACEHOLDER).astype(jnp.float32)
    # Expand the per-row virtual flag to a per-lane gate over x1 lanes (MXU).
    gate_in = jnp.dot(mask_f, e_in_ref[...], preferred_element_type=jnp.float32)
    # Zero x1 for virtual rows so one matmul yields x0@W (+ x1@W otherwise).
    x = x_ref[...] * (1.0 - gate_in)
    h = jnp.dot(x, wblk_ref[...], preferred_element_type=jnp.float32)
    # Epilogue: +2b everywhere, +(virt - b) on virtual rows' output segment.
    o_ref[...] = h + b2_ref[...] + jnp.dot(
        mask_f, dsel_ref[...], preferred_element_type=jnp.float32)


def atom_embedding(pair_node_feats, indicators, w, b, virt_emb, *, tn=4096):
    """pair_node_feats: [N, 2, Da] f32, indicators: [N] int -> [N, Dg] f32."""
    N, P, Da = pair_node_feats.shape
    assert P == 2
    assert w.shape[0] == Da
    Dg = w.shape[1]

    # ---- lane-packing geometry -------------------------------------------
    K = 2 * Da
    if K <= 128:
        Kp = max(2, 1 << (K - 1).bit_length())   # next power of two >= K
        R = 128 // Kp                            # logical rows per 128-lane row
    else:
        Kp, R = K, 1                             # degenerate fallback: no packing
    Dap = Kp // 2

    # ---- row tile (logical rows) -------------------------------------------
    unit = 8 * R                                  # 8 packed sublanes
    tn = max(unit, (tn // unit) * unit)           # round desired tile to a unit
    if N >= 4 * unit:                             # v7x: keep >= 4 grid steps
        tn = min(tn, max(unit, (N // (4 * unit)) * unit))
    tn = min(tn, pl.cdiv(N, unit) * unit)         # clamp only by the row count
    N_pad = pl.cdiv(N, tn) * tn
    tnp = tn // R                                 # packed rows per grid step

    # ---- pack inputs (free reshapes; pads only on ragged shapes) ------------
    x = pair_node_feats.astype(jnp.float32)
    ind = indicators.astype(jnp.int32)
    if Dap != Da:
        x = jnp.pad(x, ((0, 0), (0, 0), (0, Dap - Da)))
    if N_pad != N:
        x = jnp.pad(x, ((0, N_pad - N), (0, 0), (0, 0)))
        ind = jnp.pad(ind, ((0, N_pad - N),))     # pad indicator 0 != placeholder
    x = x.reshape(N_pad // R, R * Kp)             # contiguous repack, lane-dense
    ind = ind.reshape(N_pad // R, R)

    # ---- small resident constants -------------------------------------------
    w32 = w.astype(jnp.float32)
    if Dap != Da:
        w32 = jnp.pad(w32, ((0, Dap - Da), (0, 0)))
    w2 = jnp.concatenate([w32, w32], axis=0)                        # (Kp, Dg)
    wblk = jnp.kron(jnp.eye(R, dtype=jnp.float32), w2)              # (R*Kp, R*Dg)

    lane_in = np.arange(R * Kp)
    e_in = ((lane_in // Kp)[None, :] == np.arange(R)[:, None]) & (
        (lane_in % Kp) >= Dap)
    e_in = jnp.asarray(e_in, jnp.float32)                           # (R, R*Kp)
    lane_out = np.arange(R * Dg)
    seg_out = jnp.asarray(
        (lane_out // Dg)[None, :] == np.arange(R)[:, None], jnp.float32)  # (R, R*Dg)

    bias = b.reshape(1, Dg).astype(jnp.float32)
    virt = virt_emb.reshape(1, Dg).astype(jnp.float32)
    b2_t = jnp.tile(2.0 * bias, (1, R))                             # (1, R*Dg)
    dsel = seg_out * jnp.tile(virt - bias, (1, R))                  # (R, R*Dg)

    out = pl.pallas_call(
        atom_embedding_kernel,
        out_shape=jax.ShapeDtypeStruct((N_pad // R, R * Dg), jnp.float32),
        grid_spec=pltpu.PrefetchScalarGridSpec(
            num_scalar_prefetch=0,
            grid=(N_pad // tn,),
            in_specs=[
                pl.BlockSpec((tnp, R), lambda i: (i, 0)),            # indicators
                pl.BlockSpec((tnp, R * Kp), lambda i: (i, 0)),       # packed x
                pl.BlockSpec((R * Kp, R * Dg), lambda i: (0, 0)),    # block-diag W
                pl.BlockSpec((R, R * Kp), lambda i: (0, 0)),         # x1-lane one-hot
                pl.BlockSpec((R, R * Dg), lambda i: (0, 0)),         # (virt-b) selector
                pl.BlockSpec((1, R * Dg), lambda i: (0, 0)),         # 2*b tiled
            ],
            out_specs=pl.BlockSpec((tnp, R * Dg), lambda i: (i, 0)),
        ),
        compiler_params=pltpu.CompilerParams(
            dimension_semantics=("parallel",)),
    )(ind, x, wblk, e_in, dsel, b2_t)

    out = out.reshape(N_pad, Dg)                  # free, contiguous un-pack
    return out[:N] if N_pad != N else out


def _reference(pair_node_feats, indicators, w, b, virt_emb):
    h = jnp.einsum("npd,dg->npg", pair_node_feats.astype(jnp.float32),
                   w.astype(jnp.float32)) + b.reshape(1, 1, -1)
    mask = (indicators == VIRTUAL_ATOM_FEATURE_PLACEHOLDER)[:, None]
    h1 = jnp.where(mask, virt_emb.reshape(1, -1), h[:, 1, :])
    return h[:, 0, :] + h1


if __name__ == "__main__":
    key = jax.random.PRNGKey(0)

    def make_case(k, N, Da, Dg):
        k1, k2, k3, k4, k5 = jax.random.split(k, 5)
        bound = 1.0 / np.sqrt(Da)
        w = jax.random.uniform(k1, (Da, Dg), minval=-bound, maxval=bound,
                               dtype=jnp.float32)            # in_proj.weight^T
        b = jax.random.uniform(k2, (1, Dg), minval=-bound, maxval=bound,
                               dtype=jnp.float32)            # in_proj.bias
        virt = jax.random.normal(k3, (1, Dg), dtype=jnp.float32)  # virtual_atom_emb.weight
        feats = jax.random.normal(k4, (N, 2, Da), dtype=jnp.float32)
        inds = jax.random.randint(k5, (N,), minval=-1, maxval=3, dtype=jnp.int32)
        return feats, inds, w, b, virt

    k_a, k_b = jax.random.split(key, 2)

    # Case 1: module-consistent small shapes (Da=8, Dg=32), ragged N.
    feats, inds, w, b, virt = make_case(k_a, 100, 8, 32)
    ref = _reference(feats, inds, w, b, virt)
    out = jax.block_until_ready(atom_embedding(feats, inds, w, b, virt))
    assert out.shape == ref.shape
    np.testing.assert_allclose(np.asarray(out), np.asarray(ref), rtol=1e-5, atol=1e-5)

    # Case 2: small explicit tile -> multi-step grid + row-padding path.
    out2 = jax.block_until_ready(atom_embedding(feats, inds, w, b, virt, tn=64))
    np.testing.assert_allclose(np.asarray(out2), np.asarray(ref), rtol=1e-5, atol=1e-5)

    # Case 3: larger ragged N (>=4-step grid cap) + non-pow2 Da (column padding).
    feats3, inds3, w3, b3, virt3 = make_case(k_b, 1000, 5, 32)
    ref3 = _reference(feats3, inds3, w3, b3, virt3)
    out3 = jax.block_until_ready(atom_embedding(feats3, inds3, w3, b3, virt3))
    np.testing.assert_allclose(np.asarray(out3), np.asarray(ref3), rtol=1e-5, atol=1e-5)

    print("KERNEL_OK")
</pallas_src>

<mosaic_0001>
module attributes {stable_mosaic.version = 11 : i64} {
  func.func @atom_embedding_kernel(%arg0: i32, %arg1: memref<16x8xi32, #tpu.memory_space<vmem>>, %arg2: memref<16x128xf32, #tpu.memory_space<vmem>>, %arg3: memref<128x256xf32, #tpu.memory_space<vmem>>, %arg4: memref<8x128xf32, #tpu.memory_space<vmem>>, %arg5: memref<8x256xf32, #tpu.memory_space<vmem>>, %arg6: memref<1x256xf32, #tpu.memory_space<vmem>>, %arg7: memref<16x256xf32, #tpu.memory_space<vmem>>) attributes {dimension_semantics = [#tpu.dimension_semantics<parallel>], iteration_bounds = array<i64: 1>, scalar_prefetch = 0 : i64, scratch_operands = 0 : i64, tpu.core_type = #tpu.core_type<tc>, window_params = [{transform_indices = @transform_0, window_bounds = array<i64: 16, 8>}, {transform_indices = @transform_1, window_bounds = array<i64: 16, 128>}, {pipeline_mode = #tpu.pipeline_mode<synchronous>, transform_indices = @transform_2, window_bounds = array<i64: 128, 256>}, {pipeline_mode = #tpu.pipeline_mode<synchronous>, transform_indices = @transform_3, window_bounds = array<i64: 8, 128>}, {pipeline_mode = #tpu.pipeline_mode<synchronous>, transform_indices = @transform_4, window_bounds = array<i64: 8, 256>}, {pipeline_mode = #tpu.pipeline_mode<synchronous>, transform_indices = @transform_5, window_bounds = array<i64: 1, 256>}, {transform_indices = @transform_6, window_bounds = array<i64: 16, 256>}]} {
    %c0 = arith.constant 0 : index
    %c0_0 = arith.constant 0 : index
    %0 = vector.load %arg1[%c0, %c0_0] : memref<16x8xi32, #tpu.memory_space<vmem>>, vector<16x8xi32>
    %c-1_i32 = arith.constant -1 : i32
    %1 = vector.broadcast %c-1_i32 : i32 to vector<16x8xi32>
    %2 = arith.cmpi eq, %0, %1 : vector<16x8xi32>
    %3 = arith.extui %2 : vector<16x8xi1> to vector<16x8xi32>
    %4 = arith.sitofp %3 : vector<16x8xi32> to vector<16x8xf32>
    %c0_1 = arith.constant 0 : index
    %c0_2 = arith.constant 0 : index
    %5 = vector.load %arg4[%c0_1, %c0_2] : memref<8x128xf32, #tpu.memory_space<vmem>>, vector<8x128xf32>
    %cst = arith.constant dense<0.000000e+00> : vector<16x128xf32>
    %6 = tpu.matmul %4, %5, %cst {dimension_numbers = #tpu.dot_dimension_numbers<[1], [0], [0], [1], [0, 0, 1, 1], [], []>} : vector<16x8xf32>, vector<8x128xf32>, vector<16x128xf32> -> vector<16x128xf32>
    %c0_3 = arith.constant 0 : index
    %c0_4 = arith.constant 0 : index
    %7 = vector.load %arg2[%c0_3, %c0_4] : memref<16x128xf32, #tpu.memory_space<vmem>>, vector<16x128xf32>
    %cst_5 = arith.constant 1.000000e+00 : f32
    %8 = vector.broadcast %cst_5 : f32 to vector<16x128xf32>
    %9 = arith.subf %8, %6 : vector<16x128xf32>
    %10 = arith.mulf %7, %9 : vector<16x128xf32>
    %c0_6 = arith.constant 0 : index
    %c0_7 = arith.constant 0 : index
    %11 = vector.load %arg3[%c0_6, %c0_7] : memref<128x256xf32, #tpu.memory_space<vmem>>, vector<128x256xf32>
    %cst_8 = arith.constant dense<0.000000e+00> : vector<16x256xf32>
    %12 = tpu.matmul %10, %11, %cst_8 {dimension_numbers = #tpu.dot_dimension_numbers<[1], [0], [0], [1], [0, 0, 1, 1], [], []>} : vector<16x128xf32>, vector<128x256xf32>, vector<16x256xf32> -> vector<16x256xf32>
    %c0_9 = arith.constant 0 : index
    %c0_10 = arith.constant 0 : index
    %13 = vector.load %arg6[%c0_9, %c0_10] : memref<1x256xf32, #tpu.memory_space<vmem>>, vector<1x256xf32>
    %14 = vector.broadcast %13 : vector<1x256xf32> to vector<16x256xf32>
    %15 = arith.addf %12, %14 : vector<16x256xf32>
    %c0_11 = arith.constant 0 : index
    %c0_12 = arith.constant 0 : index
    %16 = vector.load %arg5[%c0_11, %c0_12] : memref<8x256xf32, #tpu.memory_space<vmem>>, vector<8x256xf32>
    %cst_13 = arith.constant dense<0.000000e+00> : vector<16x256xf32>
    %17 = tpu.matmul %4, %16, %cst_13 {dimension_numbers = #tpu.dot_dimension_numbers<[1], [0], [0], [1], [0, 0, 1, 1], [], []>} : vector<16x8xf32>, vector<8x256xf32>, vector<16x256xf32> -> vector<16x256xf32>
    %18 = arith.addf %15, %17 : vector<16x256xf32>
    %c0_14 = arith.constant 0 : index
    %c0_15 = arith.constant 0 : index
    %19 = vector.load %arg7[%c0_14, %c0_15] : memref<16x256xf32, #tpu.memory_space<vmem>>, vector<16x256xf32>
    tpu.vector_store %arg7[%c0_14, %c0_15], %18 {strides = array<i32>} : memref<16x256xf32, #tpu.memory_space<vmem>>, vector<16x256xf32>,
    return
  }
  func.func @transform_0(%arg0: i32) -> (i32, i32) {
    %c0_i32 = arith.constant 0 : i32
    %c0_i32_0 = arith.constant 0 : i32
    return %arg0, %c0_i32 : i32, i32
  }
  func.func @transform_1(%arg0: i32) -> (i32, i32) {
    %c0_i32 = arith.constant 0 : i32
    %c0_i32_0 = arith.constant 0 : i32
    return %arg0, %c0_i32 : i32, i32
  }
  func.func @transform_2(%arg0: i32) -> (i32, i32) {
    %c0_i32 = arith.constant 0 : i32
    %c0_i32_0 = arith.constant 0 : i32
    %c0_i32_1 = arith.constant 0 : i32
    return %c0_i32, %c0_i32_0 : i32, i32
  }
  func.func @transform_3(%arg0: i32) -> (i32, i32) {
    %c0_i32 = arith.constant 0 : i32
    %c0_i32_0 = arith.constant 0 : i32
    %c0_i32_1 = arith.constant 0 : i32
    return %c0_i32, %c0_i32_0 : i32, i32
  }
  func.func @transform_4(%arg0: i32) -> (i32, i32) {
    %c0_i32 = arith.constant 0 : i32
    %c0_i32_0 = arith.constant 0 : i32
    %c0_i32_1 = arith.constant 0 : i32
    return %c0_i32, %c0_i32_0 : i32, i32
  }
  func.func @transform_5(%arg0: i32) -> (i32, i32) {
    %c0_i32 = arith.constant 0 : i32
    %c0_i32_0 = arith.constant 0 : i32
    %c0_i32_1 = arith.constant 0 : i32
    return %c0_i32, %c0_i32_0 : i32, i32
  }
  func.func @transform_6(%arg0: i32) -> (i32, i32) {
    %c0_i32 = arith.constant 0 : i32
    %c0_i32_0 = arith.constant 0 : i32
    return %arg0, %c0_i32 : i32, i32
  }
}

</mosaic_0001>

<llo_original>
// kernel: tpu_custom_call.1
$region0: #{tpu_custom_call.1}
  #allocation0 [shape = 'u32[]', space=smem, size = 0x4, offset = 0x4, fixed_abs, tag = 'smem constant byte address 0x4 - core index']
  #allocation1 [shape = 'u32[72,128]{1,0:T(1,128)}', space=vmem, size = 0x9000, scoped, tag = 'internal scratch']
  %s0 = inlined_call_operand.vmem [shape: s32[16,8], index: 0, kind: input, shape index: {}]
  %s1 = inlined_call_operand.vmem [shape: f32[16,128], index: 1, kind: input, shape index: {}]
  %s2 = inlined_call_operand.hbm [shape: f32[128,256], index: 2, kind: input, shape index: {}]
  %s3 = inlined_call_operand.vmem [shape: f32[8,128], index: 3, kind: input, shape index: {}]
  %s4 = inlined_call_operand.hbm [shape: f32[8,256], index: 4, kind: input, shape index: {}]
  %s5 = inlined_call_operand.vmem [shape: f32[1,256], index: 5, kind: input, shape index: {}]
  %s6 = inlined_call_operand.hbm [shape: f32[16,256], index: 6, kind: output, shape index: {}]
  %s7 = sld [smem:[#allocation0]]
  $region42: #{tpu_custom_call.1} parent=0
    _
  %s9 = ssub.s32 1, %s7
  %s10 = scalar_select 0, %s9, %s7
  $region1: #{tpu_custom_call.1} parent=0
    #allocation2 [shape = 'u8[131072]{0}', space=vmem, size = 0x20000, scoped, tag = 'input window, operand 2, single buffered']
    #allocation3 [shape = 's32[1]{0}', space=sflag, size = 0x4, scoped, tag = 'scoped memory for tpu_custom_call.1']
    #allocation4 [shape = 's32[1]{0}', space=sflag, size = 0x4, scoped, tag = 'scoped memory for tpu_custom_call.1']
    #allocation5 [shape = 'u8[8192]{0}', space=vmem, size = 0x2000, scoped, tag = 'input window, operand 4, single buffered']
    #allocation6 [shape = 's32[1]{0}', space=sflag, size = 0x4, scoped, tag = 'scoped memory for tpu_custom_call.1']
    #allocation7 [shape = 'u8[16384]{0}', space=vmem, size = 0x4000, scoped, tag = 'output window, operand 0, single buffered']
    %11 = vsyncpa [#allocation3], 0
    %12 = vsyncpa [#allocation6], 0
    %13 = vsyncpa [#allocation4], 0
    // Predicated region
    $region2: #{tpu_custom_call.1} parent=1 // pred_check
      _
    $region3: #{tpu_custom_call.1} parent=1 // pred_check_branch
      %15 = sbr.rel (0) target = $region5
    $region4: #{tpu_custom_call.1} parent=1 // pred_region
      _
    $region5: #{tpu_custom_call.1} parent=1 // pred_fallthru
      _
    // Predicated region
    $region6: #{tpu_custom_call.1} parent=1 // pred_check
      _
    $region7: #{tpu_custom_call.1} parent=1 // pred_check_branch
      %17 = sbr.rel (0) target = $region9
    $region8: #{tpu_custom_call.1} parent=1 // pred_region
      _
    $region9: #{tpu_custom_call.1} parent=1 // pred_fallthru
      _
    // Predicated region
    $region10: #{tpu_custom_call.1} parent=1 // pred_check
      _
    $region11: #{tpu_custom_call.1} parent=1 // pred_check_branch
      %19 = sbr.rel (0) target = $region13
    $region12: #{tpu_custom_call.1} parent=1 // pred_region
      %21 = vsyncadd [#allocation3], 0
      %s22 = sshll.u32 %s2, 4
      %s23 = int_to_ptr.hbm [resolvable:$true] %s22
      %s24 = sshll.u32 [#allocation2], 4
      %s25 = int_to_ptr.vmem [resolvable:$true] %s24
      %30 = dma.hbm_to_vmem [thread:$0]  %s23, 4096, %s25, [#allocation3], 256, 256, 16
    $region13: #{tpu_custom_call.1} parent=1 // pred_fallthru
      _
    // Predicated region
    $region14: #{tpu_custom_call.1} parent=1 // pred_check
      _
    $region15: #{tpu_custom_call.1} parent=1 // pred_check_branch
      %32 = sbr.rel (0) target = $region17
    $region16: #{tpu_custom_call.1} parent=1 // pred_region
      _
    $region17: #{tpu_custom_call.1} parent=1 // pred_fallthru
      _
    // Predicated region
    $region18: #{tpu_custom_call.1} parent=1 // pred_check
      _
    $region19: #{tpu_custom_call.1} parent=1 // pred_check_branch
      %34 = sbr.rel (0) target = $region21
    $region20: #{tpu_custom_call.1} parent=1 // pred_region
      %36 = vsyncadd [#allocation6], 0
      %s38 = sshll.u32 %s4, 4
      %s39 = int_to_ptr.hbm [resolvable:$true] %s38
      %s40 = sshll.u32 [#allocation5], 4
      %s41 = int_to_ptr.vmem [resolvable:$true] %s40
      %43 = dma.hbm_to_vmem [thread:$0]  %s39, 256, %s41, [#allocation6]
    $region21: #{tpu_custom_call.1} parent=1 // pred_fallthru
      _
    // Predicated region
    $region22: #{tpu_custom_call.1} parent=1 // pred_check
      _
    $region23: #{tpu_custom_call.1} parent=1 // pred_check_branch
      %45 = sbr.rel (0) target = $region25
    $region24: #{tpu_custom_call.1} parent=1 // pred_region
      _
    $region25: #{tpu_custom_call.1} parent=1 // pred_fallthru
      _
    // Predicated region
    $region26: #{tpu_custom_call.1} parent=1 // pred_check
      _
    $region27: #{tpu_custom_call.1} parent=1 // pred_check_branch
      %47 = sbr.rel (0) target = $region29
    $region28: #{tpu_custom_call.1} parent=1 // pred_region
      %49 = dma.done [#allocation3], 4096
    $region29: #{tpu_custom_call.1} parent=1 // pred_fallthru
      _
    // Predicated region
    $region30: #{tpu_custom_call.1} parent=1 // pred_check
      _
    $region31: #{tpu_custom_call.1} parent=1 // pred_check_branch
      %51 = sbr.rel (0) target = $region33
    $region32: #{tpu_custom_call.1} parent=1 // pred_region
      %53 = dma.done [#allocation6], 256
    $region33: #{tpu_custom_call.1} parent=1 // pred_fallthru
      _
    %v54 = vld [vmem:[%s0] sm:$0xff]
    %v55 = vld [vmem:[%s0 + $0x8] sm:$0xff]
    %vm56 = vcmp.eq.s32.totalorder %v54, 4294967295
    %vm57 = vcmp.eq.s32.totalorder %v55, 4294967295
    %v58 = vsel %vm56, 1, 0
    %v59 = vsel %vm57, 1, 0
    %v60 = vcvt.s32.f32 %v58
    %v61 = vcvt.s32.f32 %v59
    %v62 = vld [vmem:[%s3] sm:$0xff]
    %vm63 = vcmask 64512
    %v65 = vsel %vm63, %v60, 0
    %v68 = vsel %vm63, %v61, 0
    %70 = vmatpush.msra.mxu0 0.0
    %71 = vmatpush.msra.mxu0 0.0
    %72 = vmatpush.msra.mxu0 0.0
    %73 = vmatpush.msra.mxu0 0.0
    %74 = vmatpush.msra.mxu0 0.0
    %75 = vmatpush.msra.mxu0 0.0
    %76 = vmatpush.msra.mxu0 0.0
    %77 = vmatpush.msra.mxu0 0.0
    %78 = vmatpush.msra.mxu0 0.0
    %79 = vmatpush.msra.mxu0 0.0
    %80 = vmatpush.msra.mxu0 0.0
    %81 = vmatpush.msra.mxu0 0.0
    %82 = vmatpush.msra.mxu0 0.0
    %83 = vmatpush.msra.mxu0 0.0
    %84 = vmatpush.msra.mxu0 0.0
    %85 = vmatpush.msra.mxu0 %v62
    %86 = vmatmul.f32.gmra.mxu0 %v65
    %v87 = vpop.f32.mrf.mxu0
    %v88 = vadd.f32 0.0, %v87
    %89 = vmatmul.f32.gmra.mxu0 %v68
    %v90 = vpop.f32.mrf.mxu0
    %v91 = vadd.f32 0.0, %v90
    %92 = vdwg.mxu0
    %v93 = vld [vmem:[%s1] sm:$0xff]
    %v94 = vld [vmem:[%s1 + $0x8] sm:$0xff]
    %v95 = vsub.f32 1.0, %v88
    %v96 = vsub.f32 1.0, %v91
    %v97 = vmul.f32 %v93, %v95
    %v98 = vmul.f32 %v94, %v96
    %v99 = vld [vmem:[#allocation2] sm:$0xff]
    %v100 = vld [vmem:[#allocation2 + $0x8] sm:$0xff]
    %v101 = vld [vmem:[#allocation2 + $0x10] sm:$0xff]
    %v102 = vld [vmem:[#allocation2 + $0x18] sm:$0xff]
    %v103 = vld [vmem:[#allocation2 + $0x20] sm:$0xff]
    %v104 = vld [vmem:[#allocation2 + $0x28] sm:$0xff]
    %v105 = vld [vmem:[#allocation2 + $0x30] sm:$0xff]
    %v106 = vld [vmem:[#allocation2 + $0x38] sm:$0xff]
    %v107 = vld [vmem:[#allocation2 + $0x40] sm:$0xff]
    %v108 = vld [vmem:[#allocation2 + $0x48] sm:$0xff]
    %v109 = vld [vmem:[#allocation2 + $0x50] sm:$0xff]
    %v110 = vld [vmem:[#allocation2 + $0x58] sm:$0xff]
    %v111 = vld [vmem:[#allocation2 + $0x60] sm:$0xff]
    %v112 = vld [vmem:[#allocation2 + $0x68] sm:$0xff]
    %v113 = vld [vmem:[#allocation2 + $0x70] sm:$0xff]
    %v114 = vld [vmem:[#allocation2 + $0x78] sm:$0xff]
    %v115 = vld [vmem:[#allocation2 + $0x80] sm:$0xff]
    %v116 = vld [vmem:[#allocation2 + $0x88] sm:$0xff]
    %v117 = vld [vmem:[#allocation2 + $0x90] sm:$0xff]
    %v118 = vld [vmem:[#allocation2 + $0x98] sm:$0xff]
    %v119 = vld [vmem:[#allocation2 + $0xa0] sm:$0xff]
    %v120 = vld [vmem:[#allocation2 + $0xa8] sm:$0xff]
    %v121 = vld [vmem:[#allocation2 + $0xb0] sm:$0xff]
    %v122 = vld [vmem:[#allocation2 + $0xb8] sm:$0xff]
    %v123 = vld [vmem:[#allocation2 + $0xc0] sm:$0xff]
    %v124 = vld [vmem:[#allocation2 + $0xc8] sm:$0xff]
    %v125 = vld [vmem:[#allocation2 + $0xd0] sm:$0xff]
    %v126 = vld [vmem:[#allocation2 + $0xd8] sm:$0xff]
    %v127 = vld [vmem:[#allocation2 + $0xe0] sm:$0xff]
    %v128 = vld [vmem:[#allocation2 + $0xe8] sm:$0xff]
    %v129 = vld [vmem:[#allocation2 + $0xf0] sm:$0xff]
    %v130 = vld [vmem:[#allocation2 + $0xf8] sm:$0xff]
    %v131 = vld [vmem:[%s5] sm:$0x3]
    %v133 = vperm.slane %v131, 0
    %v134 = vperm.slane %v131, 1
    %137 = vmatpush.msra.mxu0 %v129
    %138 = vmatpush.msra.mxu0 %v127
    %139 = vmatpush.msra.mxu0 %v125
    %140 = vmatpush.msra.mxu0 %v123
    %141 = vmatpush.msra.mxu0 %v121
    %142 = vmatpush.msra.mxu0 %v119
    %143 = vmatpush.msra.mxu0 %v117
    %144 = vmatpush.msra.mxu0 %v115
    %145 = vmatpush.msra.mxu0 %v113
    %146 = vmatpush.msra.mxu0 %v111
    %147 = vmatpush.msra.mxu0 %v109
    %148 = vmatpush.msra.mxu0 %v107
    %149 = vmatpush.msra.mxu0 %v105
    %150 = vmatpush.msra.mxu0 %v103
    %151 = vmatpush.msra.mxu0 %v101
    %152 = vmatpush.msra.mxu0 %v99
    %153 = vmatmul.f32.gmra.mxu0 %v97
    %v154 = vpop.f32.mrf.mxu0
    %v155 = vadd.f32 %v133, %v154
    %156 = vmatmul.f32.gmra.mxu0 %v98
    %v157 = vpop.f32.mrf.mxu0
    %v158 = vadd.f32 %v133, %v157
    %159 = vdwg.mxu0
    %160 = vmatpush.msra.mxu0 %v130
    %161 = vmatpush.msra.mxu0 %v128
    %162 = vmatpush.msra.mxu0 %v126
    %163 = vmatpush.msra.mxu0 %v124
    %164 = vmatpush.msra.mxu0 %v122
    %165 = vmatpush.msra.mxu0 %v120
    %166 = vmatpush.msra.mxu0 %v118
    %167 = vmatpush.msra.mxu0 %v116
    %168 = vmatpush.msra.mxu0 %v114
    %169 = vmatpush.msra.mxu0 %v112
    %170 = vmatpush.msra.mxu0 %v110
    %171 = vmatpush.msra.mxu0 %v108
    %172 = vmatpush.msra.mxu0 %v106
    %173 = vmatpush.msra.mxu0 %v104
    %174 = vmatpush.msra.mxu0 %v102
    %175 = vmatpush.msra.mxu0 %v100
    %176 = vmatmul.f32.gmra.mxu0 %v97
    %v177 = vpop.f32.mrf.mxu0
    %v178 = vadd.f32 %v134, %v177
    %179 = vmatmul.f32.gmra.mxu0 %v98
    %v180 = vpop.f32.mrf.mxu0
    %v181 = vadd.f32 %v134, %v180
    %182 = vdwg.mxu0
    %v183 = vld [vmem:[#allocation5] sm:$0xff]
    %v184 = vld [vmem:[#allocation5 + $0x8] sm:$0xff]
    %185 = vmatpush.msra.mxu0 0.0
    %186 = vmatpush.msra.mxu0 0.0
    %187 = vmatpush.msra.mxu0 0.0
    %188 = vmatpush.msra.mxu0 0.0
    %189 = vmatpush.msra.mxu0 0.0
    %190 = vmatpush.msra.mxu0 0.0
    %191 = vmatpush.msra.mxu0 0.0
    %192 = vmatpush.msra.mxu0 0.0
    %193 = vmatpush.msra.mxu0 0.0
    %194 = vmatpush.msra.mxu0 0.0
    %195 = vmatpush.msra.mxu0 0.0
    %196 = vmatpush.msra.mxu0 0.0
    %197 = vmatpush.msra.mxu0 0.0
    %198 = vmatpush.msra.mxu0 0.0
    %199 = vmatpush.msra.mxu0 0.0
    %200 = vmatpush.msra.mxu0 %v183
    %201 = vmatmul.f32.gmra.mxu0 %v65
    %v202 = vpop.f32.mrf.mxu0
    %v203 = vadd.f32 0.0, %v202
    %204 = vmatmul.f32.gmra.mxu0 %v68
    %v205 = vpop.f32.mrf.mxu0
    %v206 = vadd.f32 0.0, %v205
    %207 = vdwg.mxu0
    %208 = vmatpush.msra.mxu0 0.0
    %209 = vmatpush.msra.mxu0 0.0
    %210 = vmatpush.msra.mxu0 0.0
    %211 = vmatpush.msra.mxu0 0.0
    %212 = vmatpush.msra.mxu0 0.0
    %213 = vmatpush.msra.mxu0 0.0
    %214 = vmatpush.msra.mxu0 0.0
    %215 = vmatpush.msra.mxu0 0.0
    %216 = vmatpush.msra.mxu0 0.0
    %217 = vmatpush.msra.mxu0 0.0
    %218 = vmatpush.msra.mxu0 0.0
    %219 = vmatpush.msra.mxu0 0.0
    %220 = vmatpush.msra.mxu0 0.0
    %221 = vmatpush.msra.mxu0 0.0
    %222 = vmatpush.msra.mxu0 0.0
    %223 = vmatpush.msra.mxu0 %v184
    %224 = vmatmul.f32.gmra.mxu0 %v65
    %v225 = vpop.f32.mrf.mxu0
    %v226 = vadd.f32 0.0, %v225
    %227 = vmatmul.f32.gmra.mxu0 %v68
    %v228 = vpop.f32.mrf.mxu0
    %v229 = vadd.f32 0.0, %v228
    %230 = vdwg.mxu0
    %v231 = vadd.f32 %v155, %v203
    %v232 = vadd.f32 %v178, %v226
    %v233 = vadd.f32 %v158, %v206
    %v234 = vadd.f32 %v181, %v229
    %235 = vst [vmem:[#allocation7] sm:$0xff] %v231
    %236 = vst [vmem:[#allocation7 + $0x8] sm:$0xff] %v232
    %237 = vst [vmem:[#allocation7 + $0x10] sm:$0xff] %v233
    %238 = vst [vmem:[#allocation7 + $0x18] sm:$0xff] %v234
    // Predicated region
    $region34: #{tpu_custom_call.1} parent=1 // pred_check
      _
    $region35: #{tpu_custom_call.1} parent=1 // pred_check_branch
      %240 = sbr.rel (0) target = $region37
    $region36: #{tpu_custom_call.1} parent=1 // pred_region
      %242 = vsyncadd [#allocation4], 0
      %s243 = sshll.u32 [#allocation7], 4
      %s244 = int_to_ptr.vmem [resolvable:$true] %s243
      %s245 = sshll.u32 %s6, 4
      %s246 = int_to_ptr.hbm [resolvable:$true] %s245
      %251 = dma.vmem_to_hbm [thread:$0]  %s244, 512, %s246, [#allocation4], 256, 256, 16
    $region37: #{tpu_custom_call.1} parent=1 // pred_fallthru
      _
    // Predicated region
    $region38: #{tpu_custom_call.1} parent=1 // pred_check
      _
    $region39: #{tpu_custom_call.1} parent=1 // pred_check_branch
      %253 = sbr.rel (0) target = $region41
    $region40: #{tpu_custom_call.1} parent=1 // pred_region
      %255 = dma.done [#allocation4], 512
    $region41: #{tpu_custom_call.1} parent=1 // pred_fallthru
      _
    %256 = vsyncpa [#allocation3], 1
    %257 = vsyncpa [#allocation6], 1
    %258 = vsyncpa [#allocation4], 1

</llo_original>
